<compile_context>
chip_gen: v5e
topology: v5e:2x2
jax: 0.10.0
libtpu: 0.0.40
codegen_flags: <defaults>
</compile_context>

<pallas_src>
import functools
import math

import jax
import jax.numpy as jnp
from jax.experimental import pallas as pl
from jax.experimental.pallas import tpu as pltpu


def _round_up(a, b):
    return -(-a // b) * b


def _smooth_kl_kernel(x_ref, tgt_ref, out_ref, acc_ref, *,
                      n_rows, n_cols, tn, tv, lane_w, n_chunks,
                      pad_token_idx, smooth_val, confidence, c_row,
                      mask_rows, mask_cols):
    i = pl.program_id(0)               # row-tile axis   ("parallel")
    j = pl.program_id(1)               # vocab-tile axis ("arbitrary", innermost)
    nj = pl.num_programs(1)

    @pl.when(j == 0)
    def _init():
        acc_ref[...] = jnp.zeros_like(acc_ref)

    conf = jnp.float32(confidence)
    smth = jnp.float32(smooth_val)
    zero = jnp.float32(0.0)

    tgt = tgt_ref[...]                                                  # (tn, 1) i32
    # Single hoisted lane iota; per-chunk work only shifts the (tn, 1) target.
    col_iota = jax.lax.broadcasted_iota(jnp.int32, (tn, lane_w), 1)
    col_base = j * tv
    tgt_rel = tgt - col_base                                            # (tn, 1)

    def accumulate(masked):
        # w = conf at the target column, smth everywhere else.  Pad column and
        # invalid rows are corrected OUTSIDE this hot loop.
        for k in range(n_chunks):                                       # static count
            x = x_ref[:, k * lane_w:(k + 1) * lane_w].astype(jnp.float32)
            if masked:                 # ragged vocab tail: only in the LAST tile
                x = jnp.where(col_iota < (n_cols - col_base - k * lane_w), x, zero)
            w = jnp.where(col_iota == tgt_rel - k * lane_w, conf, smth)
            acc_ref[...] += w * x

    if mask_cols:
        @pl.when(j == nj - 1)
        def _tail_tile():
            accumulate(True)

        @pl.when(j != nj - 1)
        def _full_tile():
            accumulate(False)
    else:
        accumulate(False)

    # The pad column lives in exactly one vocab tile: remove its smooth-weight
    # contribution once per row tile instead of masking every element.
    j_pad = pad_token_idx // tv
    pad_local = pad_token_idx - j_pad * tv

    @pl.when(j == j_pad)
    def _pad_fix():
        xp = x_ref[:, pad_local:pad_local + 1].astype(jnp.float32)      # (tn, 1)
        acc_ref[...] -= jnp.where(col_iota == 0, smth * xp, zero)

    @pl.when(j == nj - 1)
    def _finish():
        row_ok = tgt != pad_token_idx                                   # (tn, 1)
        if mask_rows:
            r = jax.lax.broadcasted_iota(jnp.int32, (tn, 1), 0) + i * tn
            row_ok = jnp.logical_and(row_ok, r < n_rows)
        # Per valid row: loss = c_row - rowsum(acc).  c_row is placed at lane 0 so the
        # lane-dense partial sums to exactly that; the select also blocks NaN/garbage
        # accumulated in out-of-range tail rows.
        c_vec = jnp.where(col_iota == 0, jnp.float32(c_row), zero)
        signed = jnp.where(row_ok, c_vec - acc_ref[...], zero)          # (tn, lane_w)
        part = signed[0:8]
        for s in range(1, tn // 8):                                     # sublane fold
            part = part + signed[s * 8:(s + 1) * 8]
        out_ref[...] = part                                             # lane-dense store


def smooth_kl_div_loss(x, target, *, size, pad_token_idx, label_smoothing=0.0):
    """x: (N, V) log-probs (any float dtype), target: (N,) int ids. Scalar sum loss."""
    N, V = x.shape
    assert V == size, "x.shape[1] must equal size"

    confidence = 1.0 - float(label_smoothing)
    if label_smoothing > 0.0:
        if size <= 2:
            raise ValueError("size must be > 2 when label_smoothing > 0")
        smooth_val = float(label_smoothing) / (size - 2)
    else:
        smooth_val = 0.0
    log_smooth = math.log(smooth_val) if smooth_val > 0.0 else 0.0
    log_conf = math.log(confidence) if confidence > 0.0 else 0.0
    # Per-valid-row constant: conf*log(conf) + (V-2)*smth*log(smth).
    c_row = confidence * log_conf + (size - 2) * smooth_val * log_smooth

    itemsize = jnp.dtype(x.dtype).itemsize

    # ---- vocab (lane) tile ----
    tv = 2048 if V > 2048 else V            # multiple of 128, or the full (small) dim
    lane_w = 128 if tv % 128 == 0 else tv
    n_chunks = tv // lane_w

    # ---- per-generation VMEM budget (conservative default = v7x 64 MiB) ----
    try:
        vmem_cap = int(getattr(pltpu.get_tpu_info(), "vmem_capacity_bytes",
                               64 * 1024 * 1024))
    except Exception:
        vmem_cap = 64 * 1024 * 1024
    if vmem_cap >= 100 * 1024 * 1024:       # v5e / v6e: 128 MiB VMEM, single TC
        tile_budget, vmem_limit, row_cap, split_rows = 6 << 20, 64 << 20, 1024, False
    else:                                   # v7x: 64 MiB VMEM, 2 TCs per chip
        tile_budget, vmem_limit, row_cap, split_rows = 2 << 20, 32 << 20, 512, True

    # ---- row (sublane) tile ----
    bytes_per_row = tv * itemsize
    tn = max(8, min(row_cap, (tile_budget // bytes_per_row) // 8 * 8))
    tn = min(tn, _round_up(N, 8))           # don't over-tile tiny batches
    if split_rows and N >= 16:
        # >=2 row tiles so the "parallel" row axis shards across both TensorCores.
        tn = max(8, min(tn, _round_up(-(-N // 2), 8)))

    n_row_tiles = -(-N // tn)
    n_vocab_tiles = -(-V // tv)
    mask_rows = (N % tn) != 0
    mask_cols = (V % tv) != 0

    tgt2d = target.reshape(N, 1).astype(jnp.int32)

    kernel = functools.partial(
        _smooth_kl_kernel,
        n_rows=N, n_cols=V, tn=tn, tv=tv, lane_w=lane_w, n_chunks=n_chunks,
        pad_token_idx=int(pad_token_idx),
        smooth_val=smooth_val, confidence=confidence, c_row=c_row,
        mask_rows=mask_rows, mask_cols=mask_cols,
    )

    out_bytes = n_row_tiles * 8 * lane_w * 4
    cost = pl.CostEstimate(
        flops=5 * N * V,
        transcendentals=0,
        bytes_accessed=N * V * itemsize + N * 4 + out_bytes,
    )

    partials = pl.pallas_call(
        kernel,
        out_shape=jax.ShapeDtypeStruct((n_row_tiles * 8, lane_w), jnp.float32),
        grid_spec=pltpu.PrefetchScalarGridSpec(
            num_scalar_prefetch=0,
            grid=(n_row_tiles, n_vocab_tiles),
            in_specs=[
                pl.BlockSpec((tn, tv), lambda i, j: (i, j)),   # x (native dtype)
                pl.BlockSpec((tn, 1), lambda i, j: (i, 0)),    # target column
            ],
            out_specs=pl.BlockSpec((8, lane_w), lambda i, j: (i, 0)),
            scratch_shapes=[pltpu.VMEM((tn, lane_w), jnp.float32)],
        ),
        compiler_params=pltpu.CompilerParams(
            dimension_semantics=("parallel", "arbitrary"),
            vmem_limit_bytes=vmem_limit,
        ),
        cost_estimate=cost,
    )(x, tgt2d)

    # Tiny final reduction over per-row-tile, lane-dense partials.
    return jnp.sum(partials)


def _reference(x, target, *, size, pad_token_idx, label_smoothing):
    """Pure-JAX reference mirroring the PyTorch module."""
    confidence = 1.0 - label_smoothing
    N, V = x.shape
    smooth = label_smoothing / (size - 2) if label_smoothing > 0.0 else 0.0
    td = jnp.full((N, V), smooth, dtype=jnp.float32)
    td = td.at[jnp.arange(N), target].set(confidence)
    td = td.at[:, pad_token_idx].set(0.0)
    td = jnp.where((target == pad_token_idx)[:, None], 0.0, td)
    term = jnp.where(td > 0, td * (jnp.log(td) - x.astype(jnp.float32)), 0.0)
    return jnp.sum(term)


if __name__ == "__main__":
    key = jax.random.PRNGKey(0)
    k1, k2, k3, k4 = jax.random.split(key, 4)

    # ---- Test 1: tiny single-tile case (8 tokens, vocab 32, f32) ----
    N, V = 8, 32
    pad, ls = 0, 0.1
    logits = jax.random.normal(k1, (N, V), dtype=jnp.float32)
    x = jax.nn.log_softmax(logits, axis=-1)                  # module expects log-probs
    target = jax.random.randint(k2, (N,), 0, V, dtype=jnp.int32)
    target = target.at[3].set(pad)                           # ensure a pad row exists
    loss = jax.block_until_ready(
        smooth_kl_div_loss(x, target, size=V, pad_token_idx=pad, label_smoothing=ls))
    ref = _reference(x, target, size=V, pad_token_idx=pad, label_smoothing=ls)
    assert jnp.allclose(loss, ref, rtol=1e-5, atol=1e-5), (loss, ref)

    # ---- Test 2: ragged rows / multiple row tiles, bf16 inputs (20 tokens, vocab 300) ----
    N2, V2 = 20, 300
    pad2, ls2 = 2, 0.1
    logits2 = jax.random.normal(k3, (N2, V2), dtype=jnp.float32)
    x2 = jax.nn.log_softmax(logits2, axis=-1).astype(jnp.bfloat16)
    target2 = jax.random.randint(k4, (N2,), 0, V2, dtype=jnp.int32)
    target2 = target2.at[5].set(pad2)
    loss2 = jax.block_until_ready(
        smooth_kl_div_loss(x2, target2, size=V2, pad_token_idx=pad2,
                           label_smoothing=ls2))
    ref2 = _reference(x2, target2, size=V2, pad_token_idx=pad2, label_smoothing=ls2)
    assert jnp.allclose(loss2, ref2, rtol=1e-4, atol=1e-3), (loss2, ref2)

    # TODO(synk): the PyTorch module also caches `self.true_dist` as a side effect;
    # the materialized true_dist tensor is intentionally not returned here.
    print("KERNEL_OK")
</pallas_src>

<mosaic_0001>
module attributes {stable_mosaic.version = 11 : i64} {
  func.func @_smooth_kl_kernel(%arg0: i32, %arg1: i32, %arg2: memref<8x32xf32, #tpu.memory_space<vmem>>, %arg3: memref<8x1xi32, #tpu.memory_space<vmem>>, %arg4: memref<8x32xf32, #tpu.memory_space<vmem>>, %arg5: memref<8x32xf32, #tpu.memory_space<vmem>>) attributes {dimension_semantics = [#tpu.dimension_semantics<parallel>, #tpu.dimension_semantics<arbitrary>], iteration_bounds = array<i64: 1, 1>, scalar_prefetch = 0 : i64, scratch_operands = 1 : i64, tpu.core_type = #tpu.core_type<tc>, window_params = [{transform_indices = @transform_0, window_bounds = array<i64: 8, 32>}, {transform_indices = @transform_1, window_bounds = array<i64: 8, 1>}, {transform_indices = @transform_2, window_bounds = array<i64: 8, 32>}]} {
    %c0_i32 = arith.constant 0 : i32
    %0 = arith.cmpi eq, %arg1, %c0_i32 : i32
    %1 = arith.extui %0 : i1 to i32
    %c0_i32_0 = arith.constant 0 : i32
    %2 = arith.cmpi ne, %1, %c0_i32_0 : i32
    scf.if %2 {
      %cst_17 = arith.constant 0.000000e+00 : f32
      %26 = vector.broadcast %cst_17 : f32 to vector<8x32xf32>
      %c0_18 = arith.constant 0 : index
      %c0_19 = arith.constant 0 : index
      %27 = vector.load %arg5[%c0_18, %c0_19] : memref<8x32xf32, #tpu.memory_space<vmem>>, vector<8x32xf32>
      tpu.vector_store %arg5[%c0_18, %c0_19], %26 {strides = array<i32>} : memref<8x32xf32, #tpu.memory_space<vmem>>, vector<8x32xf32>,
    } else {
    }
    %c0 = arith.constant 0 : index
    %c0_1 = arith.constant 0 : index
    %3 = vector.load %arg3[%c0, %c0_1] : memref<8x1xi32, #tpu.memory_space<vmem>>, vector<8x1xi32>
    %4 = tpu.iota {dimensions = array<i32: 1>} : vector<8x32xi32>
    %c32_i32 = arith.constant 32 : i32
    %5 = arith.muli %arg1, %c32_i32 : i32
    %6 = vector.broadcast %5 : i32 to vector<8x1xi32>
    %7 = arith.subi %3, %6 : vector<8x1xi32>
    %c0_2 = arith.constant 0 : index
    %c0_3 = arith.constant 0 : index
    %8 = vector.load %arg2[%c0_2, %c0_3] : memref<8x32xf32, #tpu.memory_space<vmem>>, vector<8x32xf32>
    %c0_i32_4 = arith.constant 0 : i32
    %9 = vector.broadcast %c0_i32_4 : i32 to vector<8x1xi32>
    %10 = arith.subi %7, %9 : vector<8x1xi32>
    %11 = vector.broadcast %10 : vector<8x1xi32> to vector<8x32xi32>
    %12 = arith.cmpi eq, %4, %11 : vector<8x32xi32>
    %cst = arith.constant 0.899999976 : f32
    %cst_5 = arith.constant 0.00333333341 : f32
    %13 = vector.broadcast %cst : f32 to vector<8x32xf32>
    %14 = vector.broadcast %cst_5 : f32 to vector<8x32xf32>
    %15 = arith.select %12, %13, %14 : vector<8x32xi1>, vector<8x32xf32>
    %c0_6 = arith.constant 0 : index
    %c0_7 = arith.constant 0 : index
    %16 = vector.load %arg5[%c0_6, %c0_7] : memref<8x32xf32, #tpu.memory_space<vmem>>, vector<8x32xf32>
    %17 = arith.mulf %15, %8 : vector<8x32xf32>
    %18 = arith.addf %16, %17 : vector<8x32xf32>
    %c0_8 = arith.constant 0 : index
    %c0_9 = arith.constant 0 : index
    %19 = vector.load %arg5[%c0_8, %c0_9] : memref<8x32xf32, #tpu.memory_space<vmem>>, vector<8x32xf32>
    tpu.vector_store %arg5[%c0_8, %c0_9], %18 {strides = array<i32>} : memref<8x32xf32, #tpu.memory_space<vmem>>, vector<8x32xf32>,
    %c0_i32_10 = arith.constant 0 : i32
    %20 = arith.cmpi eq, %arg1, %c0_i32_10 : i32
    %21 = arith.extui %20 : i1 to i32
    %cst_11 = arith.constant 0.00333333341 : f32
    %cst_12 = arith.constant 0.000000e+00 : f32
    %c0_i32_13 = arith.constant 0 : i32
    %22 = arith.cmpi ne, %21, %c0_i32_13 : i32
    scf.if %22 {
      %c0_17 = arith.constant 0 : index
      %c0_18 = arith.constant 0 : index
      %26 = vector.load %arg2[%c0_17, %c0_18] : memref<8x32xf32, #tpu.memory_space<vmem>>, vector<8x1xf32>
      %c0_19 = arith.constant 0 : index
      %c0_20 = arith.constant 0 : index
      %27 = vector.load %arg5[%c0_19, %c0_20] : memref<8x32xf32, #tpu.memory_space<vmem>>, vector<8x32xf32>
      %c0_i32_21 = arith.constant 0 : i32
      %28 = vector.broadcast %c0_i32_21 : i32 to vector<8x32xi32>
      %29 = arith.cmpi eq, %4, %28 : vector<8x32xi32>
      %30 = vector.broadcast %cst_11 : f32 to vector<8x1xf32>
      %31 = arith.mulf %30, %26 : vector<8x1xf32>
      %32 = vector.shape_cast %31 : vector<8x1xf32> to vector<8x1xf32>
      %33 = vector.broadcast %32 : vector<8x1xf32> to vector<8x32xf32>
      %34 = vector.broadcast %cst_12 : f32 to vector<8x32xf32>
      %35 = arith.select %29, %33, %34 : vector<8x32xi1>, vector<8x32xf32>
      %36 = arith.subf %27, %35 : vector<8x32xf32>
      %c0_22 = arith.constant 0 : index
      %c0_23 = arith.constant 0 : index
      %37 = vector.load %arg5[%c0_22, %c0_23] : memref<8x32xf32, #tpu.memory_space<vmem>>, vector<8x32xf32>
      tpu.vector_store %arg5[%c0_22, %c0_23], %36 {strides = array<i32>} : memref<8x32xf32, #tpu.memory_space<vmem>>, vector<8x32xf32>,
    } else {
    }
    %c0_i32_14 = arith.constant 0 : i32
    %23 = arith.cmpi eq, %arg1, %c0_i32_14 : i32
    %24 = arith.extui %23 : i1 to i32
    %cst_15 = arith.constant 0.000000e+00 : f32
    %c0_i32_16 = arith.constant 0 : i32
    %25 = arith.cmpi ne, %24, %c0_i32_16 : i32
    scf.if %25 {
      %c0_i32_17 = arith.constant 0 : i32
      %26 = vector.broadcast %c0_i32_17 : i32 to vector<8x1xi32>
      %27 = arith.cmpi ne, %3, %26 : vector<8x1xi32>
      %c0_i32_18 = arith.constant 0 : i32
      %28 = vector.broadcast %c0_i32_18 : i32 to vector<8x32xi32>
      %29 = arith.cmpi eq, %4, %28 : vector<8x32xi32>
      %cst_19 = arith.constant -0.665202737 : f32
      %30 = vector.broadcast %cst_19 : f32 to vector<8x32xf32>
      %31 = vector.broadcast %cst_15 : f32 to vector<8x32xf32>
      %32 = arith.select %29, %30, %31 : vector<8x32xi1>, vector<8x32xf32>
      %c0_20 = arith.constant 0 : index
      %c0_21 = arith.constant 0 : index
      %33 = vector.load %arg5[%c0_20, %c0_21] : memref<8x32xf32, #tpu.memory_space<vmem>>, vector<8x32xf32>
      %34 = arith.subf %32, %33 : vector<8x32xf32>
      %35 = vector.shape_cast %27 : vector<8x1xi1> to vector<8x1xi1>
      %36 = vector.broadcast %35 : vector<8x1xi1> to vector<8x32xi1>
      %37 = vector.broadcast %cst_15 : f32 to vector<8x32xf32>
      %38 = arith.select %36, %34, %37 : vector<8x32xi1>, vector<8x32xf32>
      %c0_22 = arith.constant 0 : index
      %c0_23 = arith.constant 0 : index
      %39 = vector.load %arg4[%c0_22, %c0_23] : memref<8x32xf32, #tpu.memory_space<vmem>>, vector<8x32xf32>
      tpu.vector_store %arg4[%c0_22, %c0_23], %38 {strides = array<i32>} : memref<8x32xf32, #tpu.memory_space<vmem>>, vector<8x32xf32>,
    } else {
    }
    return
  }
  func.func @transform_0(%arg0: i32, %arg1: i32) -> (i32, i32) {
    %c0_i32 = arith.constant 0 : i32
    return %arg0, %arg1 : i32, i32
  }
  func.func @transform_1(%arg0: i32, %arg1: i32) -> (i32, i32) {
    %c0_i32 = arith.constant 0 : i32
    %c0_i32_0 = arith.constant 0 : i32
    return %arg0, %c0_i32 : i32, i32
  }
  func.func @transform_2(%arg0: i32, %arg1: i32) -> (i32, i32) {
    %c0_i32 = arith.constant 0 : i32
    %c0_i32_0 = arith.constant 0 : i32
    return %arg0, %c0_i32 : i32, i32
  }
}

</mosaic_0001>

<llo_original>
// kernel: tpu_custom_call.1
$region0: #{tpu_custom_call.1}
  #allocation0 [shape = 'u32[]', space=smem, size = 0x4, offset = 0x4, fixed_abs, tag = 'smem constant byte address 0x4 - core index']
  #allocation1 [shape = 'u32[72,128]{1,0:T(1,128)}', space=vmem, size = 0x9000, scoped, tag = 'internal scratch']
  #allocation2 [shape = 'f32[8,32]{1,0:T(8,128)}', space=vmem, size = 0x1000, scoped, tag = 'scratch operand']
  %s0 = inlined_call_operand.vmem [shape: f32[8,32], index: 0, kind: input, shape index: {}]
  %s1 = inlined_call_operand.vmem [shape: s32[8,1], index: 1, kind: input, shape index: {}]
  %s2 = inlined_call_operand.hbm [shape: f32[8,32], index: 2, kind: output, shape index: {}]
  %s3 = sld [smem:[#allocation0]]
  $region26: #{tpu_custom_call.1} parent=0
    _
  %s5 = ssub.s32 1, %s3
  %s6 = scalar_select 0, %s5, %s3
  $region1: #{tpu_custom_call.1} parent=0
    #allocation3 [shape = 'u8[4096]{0}', space=vmem, size = 0x1000, scoped, tag = 'output window, operand 0, single buffered']
    #allocation4 [shape = 's32[1]{0}', space=sflag, size = 0x4, scoped, tag = 'scoped memory for tpu_custom_call.1']
    %7 = vsyncpa [#allocation4], 0
    // Predicated region
    $region2: #{tpu_custom_call.1} parent=1 // pred_check
      _
    $region3: #{tpu_custom_call.1} parent=1 // pred_check_branch
      %9 = sbr.rel (0) target = $region5
    $region4: #{tpu_custom_call.1} parent=1 // pred_region
      _
    $region5: #{tpu_custom_call.1} parent=1 // pred_fallthru
      _
    // Predicated region
    $region6: #{tpu_custom_call.1} parent=1 // pred_check
      _
    $region7: #{tpu_custom_call.1} parent=1 // pred_check_branch
      %11 = sbr.rel (0) target = $region9
    $region8: #{tpu_custom_call.1} parent=1 // pred_region
      _
    $region9: #{tpu_custom_call.1} parent=1 // pred_fallthru
      _
    %p12 = scmp.eq.s32.totalorder 0, 0
    // Predicated region
    $region10: #{tpu_custom_call.1} parent=1 // pred_check
      %p13 = pneg %p12
    $region11: #{tpu_custom_call.1} parent=1 // pred_check_branch
      %15 = sbr.rel (%p13) target = $region13
    $region12: #{tpu_custom_call.1} parent=1 // pred_region
      %vm16 = vcmask 261120
      %17 = vst.msk [vmem:[#allocation2] sm:$0xff] %vm16, 0.0
    $region13: #{tpu_custom_call.1} parent=1 // pred_fallthru
      _
    %v18 = vld [vmem:[%s1] sm:$0xff]
    %v19 = vlaneseq
    %v20 = vand.u32 %v19, 127
    %s21 = smul.u32 0, 32
    %v22 = vstv %s21
    %v23 = vsub.s32 %v18, %v22
    %v24 = vld [vmem:[%s0] sm:$0xff]
    %25 = vset.pattern.permute.xlu0 0
    %26 = vperm.xlu0 %25, %v23
    %v27 = vpop.permute.xlu0 %26
    %vm28 = vcmp.eq.s32.totalorder %v20, %v27
    %v29 = vsel %vm28, 0.9, 0.0033333334
    %v30 = vld [vmem:[#allocation2] sm:$0xff]
    %v31 = vmul.f32 %v29, %v24
    %v32 = vadd.f32 %v30, %v31
    %vm33 = vcmask 261120
    %34 = vst.msk [vmem:[#allocation2] sm:$0xff] %vm33, %v32
    // Predicated region
    $region14: #{tpu_custom_call.1} parent=1 // pred_check
      %p35 = pneg %p12
    $region15: #{tpu_custom_call.1} parent=1 // pred_check_branch
      %37 = sbr.rel (%p35) target = $region17
    $region16: #{tpu_custom_call.1} parent=1 // pred_region
      %v38 = vld [vmem:[%s0] sm:$0xff]
      %v39 = vld [vmem:[#allocation2] sm:$0xff]
      %vm40 = vcmp.eq.s32.totalorder %v20, 0
      %v41 = vmul.f32 %v38, 0.0033333334
      %43 = vset.pattern.permute.xlu0 0
      %44 = vperm.xlu0 %43, %v41
      %v45 = vpop.permute.xlu0 %44
      %v47 = vsel %vm40, %v45, 0.0
      %v48 = vsub.f32 %v39, %v47
      %49 = vst.msk [vmem:[#allocation2] sm:$0xff] %vm33, %v48
      %vm50 = vcmp.ne.s32.totalorder %v18, 0
      %v51 = vsel %vm40, -0.66520274, 0.0
      %v52 = vld [vmem:[#allocation2] sm:$0xff]
      %v53 = vsub.f32 %v51, %v52
      %v54 = vsel %vm50, 1, 0
      %55 = vset.pattern.permute.xlu0 0
      %56 = vperm.xlu0 %55, %v54
      %v57 = vpop.permute.xlu0 %56
      %vm58 = vcmp.eq.s32.totalorder %v57, 1
      %v59 = vsel %vm58, %v53, 0.0
      %60 = vst.msk [vmem:[#allocation3] sm:$0xff] %vm33, %v59
    $region17: #{tpu_custom_call.1} parent=1 // pred_fallthru
      _
    // Predicated region
    $region18: #{tpu_custom_call.1} parent=1 // pred_check
      _
    $region19: #{tpu_custom_call.1} parent=1 // pred_check_branch
      %62 = sbr.rel (0) target = $region21
    $region20: #{tpu_custom_call.1} parent=1 // pred_region
      %64 = vsyncadd [#allocation4], 0
      %s66 = sshll.u32 [#allocation3], 4
      %s67 = int_to_ptr.vmem [resolvable:$true] %s66
      %s68 = sshll.u32 %s2, 4
      %s69 = int_to_ptr.hbm [resolvable:$true] %s68
      %71 = dma.vmem_to_hbm [thread:$0]  %s67, 128, %s69, [#allocation4]
    $region21: #{tpu_custom_call.1} parent=1 // pred_fallthru
      _
    // Predicated region
    $region22: #{tpu_custom_call.1} parent=1 // pred_check
      _
    $region23: #{tpu_custom_call.1} parent=1 // pred_check_branch
      %73 = sbr.rel (0) target = $region25
    $region24: #{tpu_custom_call.1} parent=1 // pred_region
      %75 = dma.done [#allocation4], 128
    $region25: #{tpu_custom_call.1} parent=1 // pred_fallthru
      _
    %76 = vsyncpa [#allocation4], 1

</llo_original>
